<compile_context>
chip_gen: v6e
topology: v6e:2x2x1
jax: 0.10.0
libtpu: 0.0.40
codegen_flags: <defaults>
</compile_context>

<pallas_src>
import functools

import jax
import jax.numpy as jnp
from jax.experimental import pallas as pl
from jax.experimental.pallas import tpu as pltpu

EPS = 1e-5          # nn.InstanceNorm2d default eps
KSIZE = 4           # kernel_size of the ConvTranspose2d
STRIDE = 2
PAD = 1


def _pick_divisor(n, target):
    """Largest divisor of n that is <= target (>= 1)."""
    d = min(n, target)
    while n % d:
        d -= 1
    return d


def _pick_s_tile(s, target):
    """Largest tile that divides s and is a multiple of 128 (or s itself)."""
    if s <= target:
        return s
    best = None
    t = 128
    while t <= target:
        if s % t == 0:
            best = t
        t += 128
    return best if best is not None else s


# --------------------------------------------------------------------------
# Pass 1: per-phase conv matmul (+bias) and running per-channel sum / sumsq.
# Grid: (N, Cout_groups, 4 phases, S_tiles); phase/S are "arbitrary" because
# the stats block stays resident and accumulates across them.
# --------------------------------------------------------------------------
def _conv_stats_kernel(p_ref, w_ref, b_ref, acc_ref, stats_ref):
    # p_ref:     (4*Cin, S_t)  bf16  phase patches (2x2 taps of padded x)
    # w_ref:     (CG, 4*Cin)   bf16  per-phase weight slab for this Cout group
    # b_ref:     (CG, 1)       f32   conv bias
    # acc_ref:   (CG, S_t)     f32   un-normalized conv output (this tile)
    # stats_ref: (CG, 2)       f32   running [sum, sum_sq] over phase+S axes
    ph = pl.program_id(2)
    si = pl.program_id(3)

    acc = jnp.dot(w_ref[...], p_ref[...],
                  preferred_element_type=jnp.float32)        # MXU, bf16 in / f32 acc
    acc = acc + b_ref[...]                                   # conv bias
    acc_ref[...] = acc

    # single-pass partial statistics (sum and sum of squares)
    psum = jnp.sum(acc, axis=1, keepdims=True)               # (CG, 1)
    psq = jnp.sum(acc * acc, axis=1, keepdims=True)          # (CG, 1)
    part = jnp.concatenate([psum, psq], axis=1)              # (CG, 2)

    first = jnp.logical_and(ph == 0, si == 0)

    @pl.when(first)
    def _():
        stats_ref[...] = part

    @pl.when(jnp.logical_not(first))
    def _():
        stats_ref[...] += part


# --------------------------------------------------------------------------
# Pass 2: InstanceNorm (affine=False) + ReLU + Dropout2d mask, per tile.
# --------------------------------------------------------------------------
def _norm_relu_drop_kernel(acc_ref, stats_ref, mask_ref, o_ref, *, inv_count):
    acc = acc_ref[...]                                       # (CG, S_t) f32
    st = stats_ref[...]                                      # (CG, 2)   f32
    mean = st[:, 0:1] * inv_count
    var = jnp.maximum(st[:, 1:2] * inv_count - mean * mean, 0.0)
    y = (acc - mean) * jax.lax.rsqrt(var + EPS)              # InstanceNorm2d
    y = jnp.maximum(y, 0.0)                                  # ReLU
    y = y * mask_ref[...]                                    # Dropout2d (0 or 1/(1-p))
    o_ref[...] = y.astype(o_ref.dtype)


# --------------------------------------------------------------------------
# Wrapper glue: phase decomposition of the stride-2 transposed conv.
# --------------------------------------------------------------------------
def _phase_patches(x_pad, H, W):
    """x_pad: (N, Cin, H+2, W+2) -> (N, 4, 4*Cin, H*W).
    Phase index = py*2+px; row index inside 4*Cin = (t*2+u)*Cin + ci."""
    N, Cin = x_pad.shape[0], x_pad.shape[1]
    phases = []
    for py in range(2):
        for px in range(2):
            taps = [x_pad[:, :, py + t:py + t + H, px + u:px + u + W]
                    for t in range(2) for u in range(2)]
            phases.append(jnp.stack(taps, axis=1).reshape(N, 4 * Cin, H * W))
    return jnp.stack(phases, axis=1)


def _phase_weights(w_t):
    """w_t: (Cin, Cout, K, K) PyTorch ConvTranspose2d layout -> (4, Cout, 4*Cin).
    Same (phase, tap, ci) ordering as `_phase_patches`."""
    w_flip = jnp.transpose(jnp.flip(w_t, axis=(2, 3)), (1, 0, 2, 3))  # (Cout,Cin,K,K)
    mats = []
    for py in range(2):
        for px in range(2):
            taps = [w_flip[:, :, py + 2 * t, px + 2 * u]
                    for t in range(2) for u in range(2)]
            mats.append(jnp.concatenate(taps, axis=1))                # (Cout, 4*Cin)
    return jnp.stack(mats, axis=0)


@functools.partial(jax.jit, static_argnames=("s_tile", "cout_group"))
def upsample_forward(x, w_t, bias, drop_mask, shortcut=None, *,
                     s_tile=None, cout_group=None):
    """x: (N, Cin, H, W) NCHW.  w_t: (Cin, Cout, K, K) (PyTorch ConvTranspose2d
    weight layout).  bias: (Cout,).  drop_mask: (N, Cout) with values in
    {0.0, 2.0} (training-mode Dropout2d, p=0.5)."""
    N, Cin, H, W = x.shape
    Cout, K = w_t.shape[1], w_t.shape[2]
    assert K == KSIZE
    Ho, Wo = STRIDE * H, STRIDE * W
    S = H * W                        # spatial positions per output phase
    CKK4 = 4 * Cin                   # 2x2 tap subset per phase

    S_t = _pick_s_tile(S, 2048) if s_tile is None else s_tile
    assert S % S_t == 0 and (S_t % 128 == 0 or S_t == S)
    n_sg = S // S_t
    CG = _pick_divisor(Cout, 256) if cout_group is None else cout_group
    assert Cout % CG == 0
    n_cg = Cout // CG

    # ---- glue (plain JAX, fused by XLA): pad once, build bf16 phase patches --
    x_pad = jnp.pad(x.astype(jnp.bfloat16), ((0, 0), (0, 0), (1, 1), (1, 1)))
    patches = _phase_patches(x_pad, H, W)                          # (N,4,CKK4,S) bf16
    w_ph = _phase_weights(w_t).astype(jnp.bfloat16)                # (4,Cout,CKK4)
    w_ph = w_ph.reshape(4, n_cg, CG, CKK4)
    bias_g = bias.astype(jnp.float32).reshape(n_cg, CG, 1)
    mask_g = drop_mask.astype(jnp.float32).reshape(N, n_cg, CG, 1)

    grid = (N, n_cg, 4, n_sg)

    # ---------------------------- pass 1 --------------------------------------
    blk1 = (CKK4 * S_t * 2 + CG * CKK4 * 2 + CG * 4 + CG * S_t * 4 + CG * 2 * 4)
    vmem1 = int(min(64 << 20, max(4 << 20, 2 * blk1 + (2 << 20))))
    cost1 = pl.CostEstimate(
        flops=int(2 * N * 4 * Cout * CKK4 * S),
        transcendentals=0,
        bytes_accessed=int(patches.size * 2 + w_ph.size * 2
                           + N * 4 * Cout * S * 4 + N * Cout * 2 * 4))

    acc, stats = pl.pallas_call(
        _conv_stats_kernel,
        out_shape=(
            jax.ShapeDtypeStruct((N, 4, n_cg, CG, S), jnp.float32),   # conv acc
            jax.ShapeDtypeStruct((N, n_cg, CG, 2), jnp.float32),      # [sum, sumsq]
        ),
        grid_spec=pltpu.PrefetchScalarGridSpec(
            num_scalar_prefetch=0,
            grid=grid,
            in_specs=[
                pl.BlockSpec((None, None, CKK4, S_t),
                             lambda n, c, p, s: (n, p, 0, s)),
                pl.BlockSpec((None, None, CG, CKK4),
                             lambda n, c, p, s: (p, c, 0, 0)),
                pl.BlockSpec((None, CG, 1),
                             lambda n, c, p, s: (c, 0, 0)),
            ],
            out_specs=(
                pl.BlockSpec((None, None, None, CG, S_t),
                             lambda n, c, p, s: (n, p, c, 0, s)),
                pl.BlockSpec((None, None, CG, 2),
                             lambda n, c, p, s: (n, c, 0, 0)),
            ),
        ),
        compiler_params=pltpu.CompilerParams(
            dimension_semantics=("parallel", "parallel", "arbitrary", "arbitrary"),
            vmem_limit_bytes=vmem1),
        cost_estimate=cost1,
    )(patches, w_ph, bias_g)

    # ---------------------------- pass 2 --------------------------------------
    blk2 = (CG * S_t * 4 + CG * 2 * 4 + CG * 4 + CG * S_t * 4)
    vmem2 = int(min(64 << 20, max(4 << 20, 2 * blk2 + (2 << 20))))
    cost2 = pl.CostEstimate(
        flops=int(8 * N * 4 * Cout * S),
        transcendentals=int(N * 4 * n_sg * Cout),
        bytes_accessed=int(2 * N * 4 * Cout * S * 4))

    kernel2 = functools.partial(_norm_relu_drop_kernel, inv_count=1.0 / (4 * S))
    y_ph = pl.pallas_call(
        kernel2,
        out_shape=jax.ShapeDtypeStruct((N, 4, n_cg, CG, S), jnp.float32),
        grid_spec=pltpu.PrefetchScalarGridSpec(
            num_scalar_prefetch=0,
            grid=grid,
            in_specs=[
                pl.BlockSpec((None, None, None, CG, S_t),
                             lambda n, c, p, s: (n, p, c, 0, s)),
                pl.BlockSpec((None, None, CG, 2),
                             lambda n, c, p, s: (n, c, 0, 0)),
                pl.BlockSpec((None, None, CG, 1),
                             lambda n, c, p, s: (n, c, 0, 0)),
            ],
            out_specs=pl.BlockSpec((None, None, None, CG, S_t),
                                   lambda n, c, p, s: (n, p, c, 0, s)),
        ),
        compiler_params=pltpu.CompilerParams(
            dimension_semantics=("parallel", "parallel", "parallel", "parallel"),
            vmem_limit_bytes=vmem2),
        cost_estimate=cost2,
    )(acc, stats, mask_g)

    # depth-to-space: (N, py, px, Cout, H, W) -> (N, Cout, 2H, 2W)  (pure layout)
    y = y_ph.reshape(N, 2, 2, Cout, H, W)
    y = jnp.transpose(y, (0, 3, 4, 1, 5, 2)).reshape(N, Cout, Ho, Wo)
    if shortcut is not None:
        y = jnp.concatenate([y, shortcut.astype(y.dtype)], axis=1)  # torch.cat dim=1
    return y


if __name__ == "__main__":
    key = jax.random.PRNGKey(0)
    k_x, k_w, k_b, k_d, k_s = jax.random.split(key, 5)

    N, Cin, Cout, H, W, K = 2, 4, 8, 16, 16, 4

    x = jax.random.normal(k_x, (N, Cin, H, W), dtype=jnp.float32)

    # Deterministic parameter init (PyTorch-style uniform bounds).
    fan_in = Cout * K * K
    bound = 1.0 / (fan_in ** 0.5)
    w_t = jax.random.uniform(k_w, (Cin, Cout, K, K), jnp.float32, -bound, bound)
    bias = jax.random.uniform(k_b, (Cout,), jnp.float32, -bound, bound)

    # Training-mode Dropout2d(0.5): drop whole channels, scale survivors by 2.
    # TODO(synk): RNG stream cannot match torch's; semantics are identical.
    keep = jax.random.bernoulli(k_d, 0.5, (N, Cout))
    drop_mask = keep.astype(jnp.float32) * 2.0

    shortcut = jax.random.normal(k_s, (N, Cout, 2 * H, 2 * W), dtype=jnp.float32)

    # s_tile=128 so the demo exercises the multi-S-tile stats accumulation path.
    out = upsample_forward(x, w_t, bias, drop_mask, shortcut,
                           s_tile=128, cout_group=Cout)
    jax.block_until_ready(out)
    assert out.shape == (N, 2 * Cout, 2 * H, 2 * W), out.shape

    # ---- pure-XLA f32 reference to validate the phase-decomposed kernel -----
    w_conv = jnp.transpose(jnp.flip(w_t, axis=(2, 3)), (1, 0, 2, 3))  # (Cout,Cin,K,K)
    conv = jax.lax.conv_general_dilated(
        x, w_conv, window_strides=(1, 1),
        padding=[(K - 1 - PAD, K - 1 - PAD)] * 2,
        lhs_dilation=(STRIDE, STRIDE),
        dimension_numbers=("NCHW", "OIHW", "NCHW"),
        precision=jax.lax.Precision.HIGHEST) + bias.reshape(1, -1, 1, 1)
    mean = conv.mean(axis=(2, 3), keepdims=True)
    var = ((conv - mean) ** 2).mean(axis=(2, 3), keepdims=True)
    ref = jnp.maximum((conv - mean) * jax.lax.rsqrt(var + EPS), 0.0)
    ref = ref * drop_mask[:, :, None, None]
    ref = jnp.concatenate([ref, shortcut], axis=1)

    err = float(jnp.max(jnp.abs(out - ref)))
    assert err < 0.15, f"max abs error vs reference too large: {err}"
    print("KERNEL_OK")
</pallas_src>

<mosaic_0001>
module attributes {stable_mosaic.version = 11 : i64} {
  func.func @_conv_stats_kernel(%arg0: i32, %arg1: i32, %arg2: i32, %arg3: i32, %arg4: memref<1x1x16x128xbf16, #tpu.memory_space<vmem>>, %arg5: memref<1x1x8x16xbf16, #tpu.memory_space<vmem>>, %arg6: memref<1x8x1xf32, #tpu.memory_space<vmem>>, %arg7: memref<1x1x1x8x128xf32, #tpu.memory_space<vmem>>, %arg8: memref<1x1x8x2xf32, #tpu.memory_space<vmem>>) attributes {dimension_semantics = [#tpu.dimension_semantics<parallel>, #tpu.dimension_semantics<parallel>, #tpu.dimension_semantics<arbitrary>, #tpu.dimension_semantics<arbitrary>], iteration_bounds = array<i64: 2, 1, 4, 2>, scalar_prefetch = 0 : i64, scratch_operands = 0 : i64, tpu.core_type = #tpu.core_type<tc>, window_params = [{transform_indices = @transform_0, window_bounds = array<i64: 1, 1, 16, 128>}, {transform_indices = @transform_1, window_bounds = array<i64: 1, 1, 8, 16>}, {transform_indices = @transform_2, window_bounds = array<i64: 1, 8, 1>}, {transform_indices = @transform_3, window_bounds = array<i64: 1, 1, 1, 8, 128>}, {transform_indices = @transform_4, window_bounds = array<i64: 1, 1, 8, 2>}]} {
    %c0 = arith.constant 0 : index
    %c0_0 = arith.constant 0 : index
    %c0_1 = arith.constant 0 : index
    %c0_2 = arith.constant 0 : index
    %0 = vector.load %arg5[%c0, %c0_0, %c0_1, %c0_2] : memref<1x1x8x16xbf16, #tpu.memory_space<vmem>>, vector<1x1x8x16xbf16>
    %1 = vector.shape_cast %0 : vector<1x1x8x16xbf16> to vector<8x16xbf16>
    %c0_3 = arith.constant 0 : index
    %c0_4 = arith.constant 0 : index
    %c0_5 = arith.constant 0 : index
    %c0_6 = arith.constant 0 : index
    %2 = vector.load %arg4[%c0_3, %c0_4, %c0_5, %c0_6] : memref<1x1x16x128xbf16, #tpu.memory_space<vmem>>, vector<1x1x16x128xbf16>
    %3 = vector.shape_cast %2 : vector<1x1x16x128xbf16> to vector<16x128xbf16>
    %cst = arith.constant dense<0.000000e+00> : vector<8x128xf32>
    %4 = tpu.matmul %1, %3, %cst {dimension_numbers = #tpu.dot_dimension_numbers<[1], [0], [0], [1], [0, 0, 1, 1], [], []>} : vector<8x16xbf16>, vector<16x128xbf16>, vector<8x128xf32> -> vector<8x128xf32>
    %c0_7 = arith.constant 0 : index
    %c0_8 = arith.constant 0 : index
    %c0_9 = arith.constant 0 : index
    %5 = vector.load %arg6[%c0_7, %c0_8, %c0_9] : memref<1x8x1xf32, #tpu.memory_space<vmem>>, vector<1x8x1xf32>
    %6 = vector.shape_cast %5 : vector<1x8x1xf32> to vector<8x1xf32>
    %7 = vector.broadcast %6 : vector<8x1xf32> to vector<8x128xf32>
    %8 = arith.addf %4, %7 : vector<8x128xf32>
    %c0_10 = arith.constant 0 : index
    %c0_11 = arith.constant 0 : index
    %c0_12 = arith.constant 0 : index
    %c0_13 = arith.constant 0 : index
    %c0_14 = arith.constant 0 : index
    %9 = vector.load %arg7[%c0_10, %c0_11, %c0_12, %c0_13, %c0_14] : memref<1x1x1x8x128xf32, #tpu.memory_space<vmem>>, vector<1x1x1x8x128xf32>
    %10 = vector.shape_cast %9 : vector<1x1x1x8x128xf32> to vector<8x128xf32>
    %11 = vector.shape_cast %8 : vector<8x128xf32> to vector<1x1x1x8x128xf32>
    tpu.vector_store %arg7[%c0_10, %c0_11, %c0_12, %c0_13, %c0_14], %11 {strides = array<i32>} : memref<1x1x1x8x128xf32, #tpu.memory_space<vmem>>, vector<1x1x1x8x128xf32>,
    %cst_15 = arith.constant dense<0.000000e+00> : vector<8xf32>
    %12 = vector.multi_reduction <add>, %8, %cst_15 [1] : vector<8x128xf32> to vector<8xf32>
    %13 = vector.shape_cast %12 : vector<8xf32> to vector<8x1xf32>
    %14 = arith.mulf %8, %8 : vector<8x128xf32>
    %cst_16 = arith.constant dense<0.000000e+00> : vector<8xf32>
    %15 = vector.multi_reduction <add>, %14, %cst_16 [1] : vector<8x128xf32> to vector<8xf32>
    %16 = vector.shape_cast %15 : vector<8xf32> to vector<8x1xf32>
    %17 = tpu.concatenate %13, %16 in 1 : vector<8x1xf32>, vector<8x1xf32> -> vector<8x2xf32>
    %c0_i32 = arith.constant 0 : i32
    %18 = arith.cmpi eq, %arg2, %c0_i32 : i32
    %c0_i32_17 = arith.constant 0 : i32
    %19 = arith.cmpi eq, %arg3, %c0_i32_17 : i32
    %20 = arith.andi %18, %19 : i1
    %21 = arith.extui %20 : i1 to i32
    %c0_i32_18 = arith.constant 0 : i32
    %22 = arith.cmpi ne, %21, %c0_i32_18 : i32
    scf.if %22 {
      %c0_20 = arith.constant 0 : index
      %c0_21 = arith.constant 0 : index
      %c0_22 = arith.constant 0 : index
      %c0_23 = arith.constant 0 : index
      %26 = vector.load %arg8[%c0_20, %c0_21, %c0_22, %c0_23] : memref<1x1x8x2xf32, #tpu.memory_space<vmem>>, vector<1x1x8x2xf32>
      %27 = vector.shape_cast %26 : vector<1x1x8x2xf32> to vector<8x2xf32>
      %28 = vector.shape_cast %17 : vector<8x2xf32> to vector<1x1x8x2xf32>
      tpu.vector_store %arg8[%c0_20, %c0_21, %c0_22, %c0_23], %28 {strides = array<i32>} : memref<1x1x8x2xf32, #tpu.memory_space<vmem>>, vector<1x1x8x2xf32>,
    } else {
    }
    %true = arith.constant true
    %23 = arith.xori %20, %true : i1
    %24 = arith.extui %23 : i1 to i32
    %c0_i32_19 = arith.constant 0 : i32
    %25 = arith.cmpi ne, %24, %c0_i32_19 : i32
    scf.if %25 {
      %c0_20 = arith.constant 0 : index
      %c0_21 = arith.constant 0 : index
      %c0_22 = arith.constant 0 : index
      %c0_23 = arith.constant 0 : index
      %26 = vector.load %arg8[%c0_20, %c0_21, %c0_22, %c0_23] : memref<1x1x8x2xf32, #tpu.memory_space<vmem>>, vector<1x1x8x2xf32>
      %27 = vector.shape_cast %26 : vector<1x1x8x2xf32> to vector<8x2xf32>
      %28 = arith.addf %27, %17 : vector<8x2xf32>
      %c0_24 = arith.constant 0 : index
      %c0_25 = arith.constant 0 : index
      %c0_26 = arith.constant 0 : index
      %c0_27 = arith.constant 0 : index
      %29 = vector.load %arg8[%c0_24, %c0_25, %c0_26, %c0_27] : memref<1x1x8x2xf32, #tpu.memory_space<vmem>>, vector<1x1x8x2xf32>
      %30 = vector.shape_cast %29 : vector<1x1x8x2xf32> to vector<8x2xf32>
      %31 = vector.shape_cast %28 : vector<8x2xf32> to vector<1x1x8x2xf32>
      tpu.vector_store %arg8[%c0_24, %c0_25, %c0_26, %c0_27], %31 {strides = array<i32>} : memref<1x1x8x2xf32, #tpu.memory_space<vmem>>, vector<1x1x8x2xf32>,
    } else {
    }
    return
  }
  func.func @transform_0(%arg0: i32, %arg1: i32, %arg2: i32, %arg3: i32) -> (i32, i32, i32, i32) {
    %c0_i32 = arith.constant 0 : i32
    %c0_i32_0 = arith.constant 0 : i32
    return %arg0, %arg2, %c0_i32, %arg3 : i32, i32, i32, i32
  }
  func.func @transform_1(%arg0: i32, %arg1: i32, %arg2: i32, %arg3: i32) -> (i32, i32, i32, i32) {
    %c0_i32 = arith.constant 0 : i32
    %c0_i32_0 = arith.constant 0 : i32
    %c0_i32_1 = arith.constant 0 : i32
    return %arg2, %arg1, %c0_i32, %c0_i32_0 : i32, i32, i32, i32
  }
  func.func @transform_2(%arg0: i32, %arg1: i32, %arg2: i32, %arg3: i32) -> (i32, i32, i32) {
    %c0_i32 = arith.constant 0 : i32
    %c0_i32_0 = arith.constant 0 : i32
    %c0_i32_1 = arith.constant 0 : i32
    return %arg1, %c0_i32, %c0_i32_0 : i32, i32, i32
  }
  func.func @transform_3(%arg0: i32, %arg1: i32, %arg2: i32, %arg3: i32) -> (i32, i32, i32, i32, i32) {
    %c0_i32 = arith.constant 0 : i32
    %c0_i32_0 = arith.constant 0 : i32
    return %arg0, %arg2, %arg1, %c0_i32, %arg3 : i32, i32, i32, i32, i32
  }
  func.func @transform_4(%arg0: i32, %arg1: i32, %arg2: i32, %arg3: i32) -> (i32, i32, i32, i32) {
    %c0_i32 = arith.constant 0 : i32
    %c0_i32_0 = arith.constant 0 : i32
    %c0_i32_1 = arith.constant 0 : i32
    return %arg0, %arg1, %c0_i32, %c0_i32_0 : i32, i32, i32, i32
  }
}

module attributes {stable_mosaic.version = 11 : i64} {
  func.func @_norm_relu_drop_kernel(%arg0: i32, %arg1: i32, %arg2: i32, %arg3: i32, %arg4: memref<1x1x1x8x128xf32, #tpu.memory_space<vmem>>, %arg5: memref<1x1x8x2xf32, #tpu.memory_space<vmem>>, %arg6: memref<1x1x8x1xf32, #tpu.memory_space<vmem>>, %arg7: memref<1x1x1x8x128xf32, #tpu.memory_space<vmem>>) attributes {dimension_semantics = [#tpu.dimension_semantics<parallel>, #tpu.dimension_semantics<parallel>, #tpu.dimension_semantics<parallel>, #tpu.dimension_semantics<parallel>], iteration_bounds = array<i64: 2, 1, 4, 2>, scalar_prefetch = 0 : i64, scratch_operands = 0 : i64, tpu.core_type = #tpu.core_type<tc>, window_params = [{transform_indices = @transform_0, window_bounds = array<i64: 1, 1, 1, 8, 128>}, {transform_indices = @transform_1, window_bounds = array<i64: 1, 1, 8, 2>}, {transform_indices = @transform_2, window_bounds = array<i64: 1, 1, 8, 1>}, {transform_indices = @transform_3, window_bounds = array<i64: 1, 1, 1, 8, 128>}]} {
    %c0 = arith.constant 0 : index
    %c0_0 = arith.constant 0 : index
    %c0_1 = arith.constant 0 : index
    %c0_2 = arith.constant 0 : index
    %c0_3 = arith.constant 0 : index
    %0 = vector.load %arg4[%c0, %c0_0, %c0_1, %c0_2, %c0_3] : memref<1x1x1x8x128xf32, #tpu.memory_space<vmem>>, vector<1x1x1x8x128xf32>
    %1 = vector.shape_cast %0 : vector<1x1x1x8x128xf32> to vector<8x128xf32>
    %c0_4 = arith.constant 0 : index
    %c0_5 = arith.constant 0 : index
    %c0_6 = arith.constant 0 : index
    %c0_7 = arith.constant 0 : index
    %2 = vector.load %arg5[%c0_4, %c0_5, %c0_6, %c0_7] : memref<1x1x8x2xf32, #tpu.memory_space<vmem>>, vector<1x1x8x2xf32>
    %3 = vector.shape_cast %2 : vector<1x1x8x2xf32> to vector<8x2xf32>
    %4 = vector.extract_strided_slice %3 {offsets = [0, 0], sizes = [8, 1], strides = [1, 1]} : vector<8x2xf32> to vector<8x1xf32>
    %cst = arith.constant 9.765625E-4 : f32
    %5 = vector.broadcast %cst : f32 to vector<8x1xf32>
    %6 = arith.mulf %4, %5 : vector<8x1xf32>
    %7 = vector.extract_strided_slice %3 {offsets = [0, 1], sizes = [8, 1], strides = [1, 1]} : vector<8x2xf32> to vector<8x1xf32>
    %cst_8 = arith.constant 9.765625E-4 : f32
    %8 = vector.broadcast %cst_8 : f32 to vector<8x1xf32>
    %9 = arith.mulf %7, %8 : vector<8x1xf32>
    %10 = arith.mulf %6, %6 : vector<8x1xf32>
    %11 = arith.subf %9, %10 : vector<8x1xf32>
    %cst_9 = arith.constant 0.000000e+00 : f32
    %12 = vector.broadcast %cst_9 : f32 to vector<8x1xf32>
    %13 = arith.maximumf %11, %12 : vector<8x1xf32>
    %14 = vector.broadcast %6 : vector<8x1xf32> to vector<8x128xf32>
    %15 = arith.subf %1, %14 : vector<8x128xf32>
    %cst_10 = arith.constant 9.99999974E-6 : f32
    %16 = vector.broadcast %cst_10 : f32 to vector<8x1xf32>
    %17 = arith.addf %13, %16 : vector<8x1xf32>
    %18 = math.rsqrt %17 : vector<8x1xf32>
    %19 = vector.broadcast %18 : vector<8x1xf32> to vector<8x128xf32>
    %20 = arith.mulf %15, %19 : vector<8x128xf32>
    %cst_11 = arith.constant 0.000000e+00 : f32
    %21 = vector.broadcast %cst_11 : f32 to vector<8x128xf32>
    %22 = arith.maximumf %20, %21 : vector<8x128xf32>
    %c0_12 = arith.constant 0 : index
    %c0_13 = arith.constant 0 : index
    %c0_14 = arith.constant 0 : index
    %c0_15 = arith.constant 0 : index
    %23 = vector.load %arg6[%c0_12, %c0_13, %c0_14, %c0_15] : memref<1x1x8x1xf32, #tpu.memory_space<vmem>>, vector<1x1x8x1xf32>
    %24 = vector.shape_cast %23 : vector<1x1x8x1xf32> to vector<8x1xf32>
    %25 = vector.broadcast %24 : vector<8x1xf32> to vector<8x128xf32>
    %26 = arith.mulf %22, %25 : vector<8x128xf32>
    %c0_16 = arith.constant 0 : index
    %c0_17 = arith.constant 0 : index
    %c0_18 = arith.constant 0 : index
    %c0_19 = arith.constant 0 : index
    %c0_20 = arith.constant 0 : index
    %27 = vector.load %arg7[%c0_16, %c0_17, %c0_18, %c0_19, %c0_20] : memref<1x1x1x8x128xf32, #tpu.memory_space<vmem>>, vector<1x1x1x8x128xf32>
    %28 = vector.shape_cast %27 : vector<1x1x1x8x128xf32> to vector<8x128xf32>
    %29 = vector.shape_cast %26 : vector<8x128xf32> to vector<1x1x1x8x128xf32>
    tpu.vector_store %arg7[%c0_16, %c0_17, %c0_18, %c0_19, %c0_20], %29 {strides = array<i32>} : memref<1x1x1x8x128xf32, #tpu.memory_space<vmem>>, vector<1x1x1x8x128xf32>,
    return
  }
  func.func @transform_0(%arg0: i32, %arg1: i32, %arg2: i32, %arg3: i32) -> (i32, i32, i32, i32, i32) {
    %c0_i32 = arith.constant 0 : i32
    %c0_i32_0 = arith.constant 0 : i32
    return %arg0, %arg2, %arg1, %c0_i32, %arg3 : i32, i32, i32, i32, i32
  }
  func.func @transform_1(%arg0: i32, %arg1: i32, %arg2: i32, %arg3: i32) -> (i32, i32, i32, i32) {
    %c0_i32 = arith.constant 0 : i32
    %c0_i32_0 = arith.constant 0 : i32
    %c0_i32_1 = arith.constant 0 : i32
    return %arg0, %arg1, %c0_i32, %c0_i32_0 : i32, i32, i32, i32
  }
  func.func @transform_2(%arg0: i32, %arg1: i32, %arg2: i32, %arg3: i32) -> (i32, i32, i32, i32) {
    %c0_i32 = arith.constant 0 : i32
    %c0_i32_0 = arith.constant 0 : i32
    %c0_i32_1 = arith.constant 0 : i32
    return %arg0, %arg1, %c0_i32, %c0_i32_0 : i32, i32, i32, i32
  }
  func.func @transform_3(%arg0: i32, %arg1: i32, %arg2: i32, %arg3: i32) -> (i32, i32, i32, i32, i32) {
    %c0_i32 = arith.constant 0 : i32
    %c0_i32_0 = arith.constant 0 : i32
    return %arg0, %arg2, %arg1, %c0_i32, %arg3 : i32, i32, i32, i32, i32
  }
}

</mosaic_0001>

<llo_original>
// kernel: upsample_forward.2
$region0: #{upsample_forward.2}
  #allocation0 [shape = 'u32[]', space=smem, size = 0x4, offset = 0x4, fixed_abs, tag = 'smem constant byte address 0x4 - core index']
  #allocation1 [shape = 'u32[144,128]{1,0:T(1,128)}', space=vmem, size = 0x12000, scoped, tag = 'internal scratch']
  %s0 = inlined_call_operand.vmem [shape: bf16[2,4,16,256], index: 0, kind: input, shape index: {}]
  %s1 = inlined_call_operand.vmem [shape: bf16[4,1,8,16], index: 1, kind: input, shape index: {}]
  %s2 = inlined_call_operand.vmem [shape: f32[1,8,1], index: 2, kind: input, shape index: {}]
  %s3 = inlined_call_operand.vmem [shape: f32[2,4,1,8,256], index: 3, kind: output, shape index: {0}]
  %s4 = inlined_call_operand.vmem [shape: f32[2,1,8,2], index: 4, kind: output, shape index: {1}]
  %5 = xla_tuple %s3, %s4
  %s6 = sld [smem:[#allocation0]]
  $region102: #{upsample_forward.2} parent=0
    _
  %s8 = ssub.s32 1, %s6
  %s9 = scalar_select 0, %s8, %s6
  $region1: #{upsample_forward.2} parent=0
    #allocation2 [shape = 'u8[8192]{0}', space=vmem, size = 0x2000, scoped, tag = 'input window, operand 0']
    loop: start=0, step=1, limit=18
    $region2: #{upsample_forward.2} parent=1 // loop_pre_header
      _
    $region3: #{upsample_forward.2} parent=1 // loop_header
      %s11 = sphi 0, %s15
      %p12 = scmp.ge.s32.totalorder %s11, 18
      %s18 = sphi 0, %s44
      %s19 = sphi 0, %s40
      %s20 = sphi 0, %s36
      %s21 = sphi 0, %s32
      %s22 = sphi 0, %s18
      %s23 = sphi 0, %s19
      %s24 = sphi 0, %s20
      %s25 = sphi 0, %s21
      %s26 = sphi 0, %s22
      %s27 = sphi 0, %s23
      %s28 = sphi 0, %s24
      %s29 = sphi 0, %s25
      %s51 = sphi 0, %s53
      %s54 = sphi 0, %s51
      %s55 = sphi 0, %s54
      %s71 = sphi 0, %s55
      %s79 = sphi 0, %s81
      %s82 = sphi 0, %s79
      %s83 = sphi 0, %s82
      %s99 = sphi 0, %s83
      %s105 = sphi 0, %s107
      %s108 = sphi 0, %s105
      %s109 = sphi 0, %s108
      %s125 = sphi 0, %s109
      %s137 = sphi 0, %s139
      %s140 = sphi 0, %s137
      %s141 = sphi 0, %s140
      %s157 = sphi 0, %s141
      %s165 = sphi 0, %s167
      %s168 = sphi 0, %s165
      %s169 = sphi 0, %s168
      %s185 = sphi 0, %s169
    $region4: #{upsample_forward.2} parent=1 // loop_header_branch
      %14 = sbr.rel (%p12) target = $region8
    $region5: #{upsample_forward.2} parent=1 // loop_body
      %s16 = ssub.s32 %s11, 1
      %s17 = ssub.s32 %s11, 2
      %s30 = sadd.s32 1, %s21
      %p31 = scmp.ge.s32.totalorder %s30, 2
      %s32 = scalar_select %p31, 0, %s30
      %s33 = sadd.s32 1, %s20
      %s34 = scalar_select %p31, %s33, %s20
      %p35 = scmp.ge.s32.totalorder %s34, 4
      %s36 = scalar_select %p35, 0, %s34
      %s37 = sadd.s32 1, %s19
      %s38 = scalar_select %p35, %s37, %s19
      %p39 = scmp.ge.s32.totalorder %s38, 1
      %s40 = scalar_select %p39, 0, %s38
      %s41 = sadd.s32 1, %s18
      %s42 = scalar_select %p39, %s41, %s18
      %p43 = scmp.ge.s32.totalorder %s42, 2
      %s44 = scalar_select %p43, 0, %s42
      %s45 = ssub.s32 %s18, %s44
      %s46 = ssub.s32 %s20, %s36
      %s47 = sor.u32 %s45, %s46
      %s48 = ssub.s32 %s21, %s32
      %s49 = sor.u32 %s47, %s48
      %p50 = scmp.eq.s32.totalorder %s49, 0
      %s52 = sadd.s32 %s51, 1
      %s53 = scalar_select %p50, %s51, %s52
      %p56 = pneg %p50
      %p57 = scmp.eq.s32.totalorder %s11, 15
      %p58 = por %p56, %p57
      %p59 = scmp.ne.s32.totalorder %s51, %s54
      %p60 = scmp.eq.s32.totalorder %s11, 0
      %p61 = por %p59, %p60
      %p62 = scmp.ne.s32.totalorder %s51, %s54
      %p63 = scmp.eq.s32.totalorder %s16, 15
      %p64 = por %p62, %p63
      %p65 = scmp.ne.s32.totalorder %s54, %s55
      %p66 = scmp.eq.s32.totalorder %s16, 0
      %p67 = por %p65, %p66
      %p68 = scmp.ne.s32.totalorder %s54, %s55
      %p69 = scmp.eq.s32.totalorder %s17, 15
      %p70 = por %p68, %p69
      %p72 = scmp.ne.s32.totalorder %s55, %s71
      %p73 = scmp.eq.s32.totalorder %s17, 0
      %p74 = por %p72, %p73
      %s75 = ssub.s32 %s20, %s36
      %s76 = ssub.s32 %s19, %s40
      %s77 = sor.u32 %s75, %s76
      %p78 = scmp.eq.s32.totalorder %s77, 0
      %s80 = sadd.s32 %s79, 1
      %s81 = scalar_select %p78, %s79, %s80
      %p84 = pneg %p78
      %p85 = scmp.eq.s32.totalorder %s11, 15
      %p86 = por %p84, %p85
      %p87 = scmp.ne.s32.totalorder %s79, %s82
      %p88 = scmp.eq.s32.totalorder %s11, 0
      %p89 = por %p87, %p88
      %p90 = scmp.ne.s32.totalorder %s79, %s82
      %p91 = scmp.eq.s32.totalorder %s16, 15
      %p92 = por %p90, %p91
      %p93 = scmp.ne.s32.totalorder %s82, %s83
      %p94 = scmp.eq.s32.totalorder %s16, 0
      %p95 = por %p93, %p94
      %p96 = scmp.ne.s32.totalorder %s82, %s83
      %p97 = scmp.eq.s32.totalorder %s17, 15
      %p98 = por %p96, %p97
      %p100 = scmp.ne.s32.totalorder %s83, %s99
      %p101 = scmp.eq.s32.totalorder %s17, 0
      %p102 = por %p100, %p101
      %s103 = ssub.s32 %s19, %s40
      %p104 = scmp.eq.s32.totalorder %s103, 0
      %s106 = sadd.s32 %s105, 1
      %s107 = scalar_select %p104, %s105, %s106
      %p110 = pneg %p104
      %p111 = scmp.eq.s32.totalorder %s11, 15
      %p112 = por %p110, %p111
      %p113 = scmp.ne.s32.totalorder %s105, %s108
      %p114 = scmp.eq.s32.totalorder %s11, 0
      %p115 = por %p113, %p114
      %p116 = scmp.ne.s32.totalorder %s105, %s108
      %p117 = scmp.eq.s32.totalorder %s16, 15
      %p118 = por %p116, %p117
      %p119 = scmp.ne.s32.totalorder %s108, %s109
      %p120 = scmp.eq.s32.totalorder %s16, 0
      %p121 = por %p119, %p120
      %p122 = scmp.ne.s32.totalorder %s108, %s109
      %p123 = scmp.eq.s32.totalorder %s17, 15
      %p124 = por %p122, %p123
      %p126 = scmp.ne.s32.totalorder %s109, %s125
      %p127 = scmp.eq.s32.totalorder %s17, 0
      %p128 = por %p126, %p127
      %s129 = ssub.s32 %s18, %s44
      %s130 = ssub.s32 %s20, %s36
      %s131 = sor.u32 %s129, %s130
      %s132 = ssub.s32 %s19, %s40
      %s133 = sor.u32 %s131, %s132
      %s134 = ssub.s32 %s21, %s32
      %s135 = sor.u32 %s133, %s134
      %p136 = scmp.eq.s32.totalorder %s135, 0
      %s138 = sadd.s32 %s137, 1
      %s139 = scalar_select %p136, %s137, %s138
      %p142 = pneg %p136
      %p143 = scmp.eq.s32.totalorder %s11, 15
      %p144 = por %p142, %p143
      %p145 = scmp.ne.s32.totalorder %s137, %s140
      %p146 = scmp.eq.s32.totalorder %s11, 0
      %p147 = por %p145, %p146
      %p148 = scmp.ne.s32.totalorder %s137, %s140
      %p149 = scmp.eq.s32.totalorder %s16, 15
      %p150 = por %p148, %p149
      %p151 = scmp.ne.s32.totalorder %s140, %s141
      %p152 = scmp.eq.s32.totalorder %s16, 0
      %p153 = por %p151, %p152
      %p154 = scmp.ne.s32.totalorder %s140, %s141
      %p155 = scmp.eq.s32.totalorder %s17, 15
      %p156 = por %p154, %p155
      %p158 = scmp.ne.s32.totalorder %s141, %s157
      %p159 = scmp.eq.s32.totalorder %s17, 0
      %p160 = por %p158, %p159
      %s161 = ssub.s32 %s18, %s44
      %s162 = ssub.s32 %s19, %s40
      %s163 = sor.u32 %s161, %s162
      %p164 = scmp.eq.s32.totalorder %s163, 0
      %s166 = sadd.s32 %s165, 1
      %s167 = scalar_select %p164, %s165, %s166
      %p170 = pneg %p164
      %p171 = scmp.eq.s32.totalorder %s11, 15
      %p172 = por %p170, %p171
      %p173 = scmp.ne.s32.totalorder %s165, %s168
      %p174 = scmp.eq.s32.totalorder %s11, 0
      %p175 = por %p173, %p174
      %p176 = scmp.ne.s32.totalorder %s165, %s168
      %p177 = scmp.eq.s32.totalorder %s16, 15
      %p178 = por %p176, %p177
      %p179 = scmp.ne.s32.totalorder %s168, %s169
      %p180 = scmp.eq.s32.totalorder %s16, 0
      %p181 = por %p179, %p180
      %p182 = scmp.ne.s32.totalorder %s168, %s169
      %p183 = scmp.eq.s32.totalorder %s17, 15
      %p184 = por %p182, %p183
      %p186 = scmp.ne.s32.totalorder %s169, %s185
      %p187 = scmp.eq.s32.totalorder %s17, 0
      %p188 = por %p186, %p187
      %p189 = scmp.le.s32.totalorder 1, %s11
      %p190 = scmp.lt.s32.totalorder %s11, 17
      %p191 = pnand %p189, %p190
      %p192 = pneg %p191
      // Predicated region
      $region9: #{upsample_forward.2} parent=5 // pred_check
        _
      $region10: #{upsample_forward.2} parent=5 // pred_check_branch
        %194 = sbr.rel (%p191) target = $region12
      $region11: #{upsample_forward.2} parent=5 // pred_region
        %s195 = ssub.s32 %s11, 1
        // Predicated region
        $region13: #{upsample_forward.2} parent=11 // pred_check
          %p196 = pneg %p121
        $region14: #{upsample_forward.2} parent=11 // pred_check_branch
          %198 = sbr.rel (%p196) target = $region16
        $region15: #{upsample_forward.2} parent=11 // pred_region
          %p199 = scmp.lt.s32.totalorder %s23, 0
          %s200 = scalar_select %p199, %s23, 0
          %s201 = smul.addr %s200, 8
          %s202 = scalar_lea.vmem %s2, %s201
        $region16: #{upsample_forward.2} parent=11 // pred_fallthru
          _
      $region12: #{upsample_forward.2} parent=5 // pred_fallthru
        _
      %p203 = scmp.lt.s32.totalorder %s11, 16
      // Predicated region
      $region17: #{upsample_forward.2} parent=5 // pred_check
        %p204 = pneg %p203
      $region18: #{upsample_forward.2} parent=5 // pred_check_branch
        %206 = sbr.rel (%p204) target = $region20
      $region19: #{upsample_forward.2} parent=5 // pred_region
        // Predicated region
        $region21: #{upsample_forward.2} parent=19 // pred_check
          %p207 = pneg %p61
        $region22: #{upsample_forward.2} parent=19 // pred_check_branch
          %209 = sbr.rel (%p207) target = $region24
        $region23: #{upsample_forward.2} parent=19 // pred_region
          %s210 = sand.u32 %s51, 1
          %s211 = sand.u32 %s51, 1
          %s212 = smul.addr %s211, 8
          %s213 = scalar_lea.vmem [#allocation2], %s212
          %s214 = smul.addr %s20, 4
          %s215 = sadd.s32 %s21, %s214
          %s216 = smul.addr %s18, 16
          %s217 = sadd.s32 %s215, %s216
          %s218 = smul.addr %s217, 4
          %s219 = scalar_lea.vmem %s0, %s218
          // Predicated region
          $region25: #{upsample_forward.2} parent=23 // pred_check
            _
          $region26: #{upsample_forward.2} parent=23 // pred_check_branch
            %221 = sbr.rel (0) target = $region28
          $region27: #{upsample_forward.2} parent=23 // pred_region
            // Predicated region
            $region29: #{upsample_forward.2} parent=27 // pred_check
              _
            $region30: #{upsample_forward.2} parent=27 // pred_check_branch
              %223 = sbr.rel target = $region32
            $region31: #{upsample_forward.2} parent=27 // pred_region
              // Predicated region
              $region44: #{upsample_forward.2} parent=31 // pred_check
                _
              $region45: #{upsample_forward.2} parent=31 // pred_check_branch
                %241 = sbr.rel (0) target = $region47
              $region46: #{upsample_forward.2} parent=31 // pred_region
                loop: start=0, step=1, limit=1
                $region48: #{upsample_forward.2} parent=46 // loop_pre_header
                  _
                $region49: #{upsample_forward.2} parent=46 // loop_header
                  %s243 = sphi 0, %s247
                  %p244 = scmp.ge.s32.totalorder %s243, 1
                  %s248 = sphi %s219, %s219
                  %s249 = sphi %s213, %s213
                $region50: #{upsample_forward.2} parent=46 // loop_header_branch
                  %246 = sbr.rel (%p244) target = $region54
                $region51: #{upsample_forward.2} parent=46 // loop_body
                  _
                $region52: #{upsample_forward.2} parent=46 // loop_footer
                  %s247 = sadd.s32 1, %s243
                $region53: #{upsample_forward.2} parent=46 // loop_footer_branch
                  %242 = sbr.rel target = $region49
                $region54: #{upsample_forward.2} parent=46 // loop_exit
                  _
                %s251 = ssub.s32 16, 1
                loop: start=0, step=1, limit=1
                $region55: #{upsample_forward.2} parent=46 // loop_pre_header
                  _
                $region56: #{upsample_forward.2} parent=46 // loop_header
                  %s253 = sphi 0, %s257
                  %p254 = scmp.ge.s32.totalorder %s253, 1
                  %s258 = sphi %s219, %s219
                  %s259 = sphi %s213, %s213
                $region57: #{upsample_forward.2} parent=46 // loop_header_branch
                  %256 = sbr.rel (%p254) target = $region61
                $region58: #{upsample_forward.2} parent=46 // loop_body
                  %v260 = vld [vmem:[%s258] sm:%s251]
                  %261 = vst [vmem:[%s259] sm:%s251] %v260
                  %v262 = vld [vmem:[%s258 + $0x8] sm:%s251]
                  %263 = vst [vmem:[%s259 + $0x4] sm:%s251] %v262
                $region59: #{upsample_forward.2} parent=46 // loop_footer
                  %s257 = sadd.s32 1, %s253
                $region60: #{upsample_forward.2} parent=46 // loop_footer_branch
                  %252 = sbr.rel target = $region56
                $region61: #{upsample_forward.2} parent=46 // loop_exit
                  _
              $region47: #{upsample_forward.2} parent=31 // pred_fallthru
                _
            $region32: #{upsample_forward.2} parent=27 // pred_fallthru
              _
            // Predicated region
            $region33: #{upsample_forward.2} parent=27 // pred_check
              _
            $region34: #{upsample_forward.2} parent=27 // pred_check_branch
              %225 = sbr.rel (0) target = $region36
            $region35: #{upsample_forward.2} parent=27 // pred_region
              %s227 = ssub.s32 16, 1
              loop: start=0, step=1, limit=1
              $region37: #{upsample_forward.2} parent=35 // loop_pre_header
                _
              $region38: #{upsample_forward.2} parent=35 // loop_header
                %s229 = sphi 0, %s233
                %p230 = scmp.ge.s32.totalorder %s229, 1
                %s234 = sphi %s219, %s219
                %s235 = sphi %s213, %s213
              $region39: #{upsample_forward.2} parent=35 // loop_header_branch
                %232 = sbr.rel (%p230) target = $region43
              $region40: #{upsample_forward.2} parent=35 // loop_body
                %v236 = vld [vmem:[%s234] sm:%s227]
                %237 = vst [vmem:[%s235] sm:%s227] %v236
                %v238 = vld [vmem:[%s234 + $0x8] sm:%s227]
                %239 = vst [vmem:[%s235 + $0x4] sm:%s227] %v238
              $region41: #{upsample_forward.2} parent=35 // loop_footer
                %s233 = sadd.s32 1, %s229
              $region42: #{upsample_forward.2} parent=35 // loop_footer_branch
                %228 = sbr.rel target = $region38
              $region43: #{upsample_forward.2} parent=35 // loop_exit
                _
            $region36: #{upsample_forward.2} parent=27 // pred_fallthru
              _
          $region28: #{upsample_forward.2} parent=23 // pred_fallthru
            _
          %264 = vnop
        $region24: #{upsample_forward.2} parent=19 // pred_fallthru
          _
        // Predicated region
        $region62: #{upsample_forward.2} parent=19 // pred_check
          %p265 = pneg %p89
        $region63: #{upsample_forward.2} parent=19 // pred_check_branch
          %267 = sbr.rel (%p265) target = $region65
        $region64: #{upsample_forward.2} parent=19 // pred_region
          %p268 = scmp.lt.s32.totalorder %s20, 3
          %s269 = scalar_select %p268, %s20, 3
          %p270 = scmp.lt.s32.totalorder %s19, 0
          %s271 = scalar_select %p270, %s19, 0
          %s272 = sadd.s32 %s271, %s269
          %s273 = smul.addr %s272, 4
          %s274 = scalar_lea.vmem %s1, %s273
        $region65: #{upsample_forward.2} parent=19 // pred_fallthru
          _
      $region20: #{upsample_forward.2} parent=5 // pred_fallthru
        _
      %p275 = scmp.le.s32.totalorder 1, %s11
      %p276 = scmp.lt.s32.totalorder %s11, 17
      %p277 = pnand %p275, %p276
      %p278 = pneg %p277
      // Predicated region
      $region66: #{upsample_forward.2} parent=5 // pred_check
        _
      $region67: #{upsample_forward.2} parent=5 // pred_check_branch
        %280 = sbr.rel (%p277) target = $region69
      $region68: #{upsample_forward.2} parent=5 // pred_region
        %s281 = ssub.s32 %s11, 1
        %s282 = sand.u32 %s54, 1
        %s283 = sand.u32 %s54, 1
        %s284 = smul.addr %s283, 8
        %s285 = scalar_lea.vmem [#allocation2], %s284
        // Predicated region
        $region70: #{upsample_forward.2} parent=68 // pred_check
          %p286 = pneg %p67
        $region71: #{upsample_forward.2} parent=68 // pred_check_branch
          %288 = sbr.rel (%p286) target = $region73
        $region72: #{upsample_forward.2} parent=68 // pred_region
          _
        $region73: #{upsample_forward.2} parent=68 // pred_fallthru
          _
        %s289 = sand.u32 %s54, 1
        %s290 = sand.u32 %s54, 1
        %s291 = smul.addr %s290, 8
        %s292 = scalar_lea.vmem [#allocation2], %s291
        %p293 = pneg %p67
        %p294 = pneg %p64
        %p295 = scmp.lt.s32.totalorder %s24, 3
        %s296 = scalar_select %p295, %s24, 3
        %p297 = scmp.lt.s32.totalorder %s23, 0
        %s298 = scalar_select %p297, %s23, 0
        %s299 = sadd.s32 %s298, %s296
        %s300 = smul.addr %s299, 4
        %s301 = scalar_lea.vmem %s1, %s300
        %p302 = pneg %p95
        %p303 = pneg %p92
        %p304 = scmp.lt.s32.totalorder %s23, 0
        %s305 = scalar_select %p304, %s23, 0
        %s306 = smul.addr %s305, 8
        %s307 = scalar_lea.vmem %s2, %s306
        %p308 = pneg %p121
        %p309 = pneg %p118
        %p310 = pneg %p153
        %p311 = pneg %p150
        %p312 = scmp.lt.s32.totalorder %s22, 1
        %s313 = scalar_select %p312, %s22, 1
        %p314 = scmp.lt.s32.totalorder %s24, 3
        %s315 = scalar_select %p314, %s24, 3
        %p316 = scmp.lt.s32.totalorder %s23, 0
        %s317 = scalar_select %p316, %s23, 0
        %p318 = scmp.lt.s32.totalorder %s25, 1
        %s319 = scalar_select %p318, %s25, 1
        %s320 = smul.addr %s317, 2
        %s321 = sadd.s32 %s319, %s320
        %s322 = smul.addr %s315, 2
        %s323 = sadd.s32 %s321, %s322
        %s324 = smul.addr %s313, 8
        %s325 = sadd.s32 %s323, %s324
        %s326 = smul.addr %s325, 8
        %s327 = scalar_lea.vmem %s3, %s326
        %p328 = pneg %p181
        %p329 = pneg %p178
        %p330 = scmp.lt.s32.totalorder %s22, 1
        %s331 = scalar_select %p330, %s22, 1
        %p332 = scmp.lt.s32.totalorder %s23, 0
        %s333 = scalar_select %p332, %s23, 0
        %s334 = sadd.s32 %s333, %s331
        %s335 = smul.addr %s334, 8
        %s336 = scalar_lea.vmem %s4, %s335
        %p337 = scmp.lt.s32.totalorder %s24, 3
        %s338 = scalar_select %p337, %s24, 3
        %p339 = scmp.lt.s32.totalorder %s23, 0
        %s340 = scalar_select %p339, %s23, 0
        %s341 = sadd.s32 %s340, %s338
        %s342 = smul.addr %s341, 4
        %s343 = scalar_lea.vmem %s1, %s342
        %p344 = scmp.lt.s32.totalorder %s23, 0
        %s345 = scalar_select %p344, %s23, 0
        %s346 = smul.addr %s345, 8
        %s347 = scalar_lea.vmem %s2, %s346
        %p348 = scmp.lt.s32.totalorder %s22, 1
        %s349 = scalar_select %p348, %s22, 1
        %p350 = scmp.lt.s32.totalorder %s24, 3
        %s351 = scalar_select %p350, %s24, 3
        %p352 = scmp.lt.s32.totalorder %s23, 0
        %s353 = scalar_select %p352, %s23, 0
        %p354 = scmp.lt.s32.totalorder %s25, 1
        %s355 = scalar_select %p354, %s25, 1
        %s356 = smul.addr %s353, 2
        %s357 = sadd.s32 %s355, %s356
        %s358 = smul.addr %s351, 2
        %s359 = sadd.s32 %s357, %s358
        %s360 = smul.addr %s349, 8
        %s361 = sadd.s32 %s359, %s360
        %s362 = smul.addr %s361, 8
        %s363 = scalar_lea.vmem %s3, %s362
        %p364 = scmp.lt.s32.totalorder %s22, 1
        %s365 = scalar_select %p364, %s22, 1
        %p366 = scmp.lt.s32.totalorder %s23, 0
        %s367 = scalar_select %p366, %s23, 0
        %s368 = sadd.s32 %s367, %s365
        %s369 = smul.addr %s368, 8
        %s370 = scalar_lea.vmem %s4, %s369
        %v372 = vld [vmem:[%s343] sm:$0xf]
        %v373 = vld [vmem:[%s285] sm:$0xf]
        %v374 = vld [vmem:[%s285 + $0x4] sm:$0xf]
        %v375 = vld [vmem:[%s347] sm:$0xff]
        %377 = vset.pattern.permute.xlu0 0
        %378 = vperm.xlu0 %377, %v375
        %v379 = vpop.permute.xlu0 %378
        %v383 = vunpack.c.l.b16 %v373
        %v384 = vunpack.c.l.b16 %v374
        %v385 = vpack.c.b16 %v384, %v383
        %vm387 = vcmask 130048
        %v389 = vsel %vm387, %v372, 0
        %391 = vmatprep.subr.bf16.mxu0 0
        %392 = vmatpush1.bf16.msra.mxu0 0
        %393 = vmatprep.subr.bf16.mxu0 0
        %394 = vmatpush1.bf16.msra.mxu0 0
        %395 = vmatprep.subr.bf16.mxu0 0
        %396 = vmatpush1.bf16.msra.mxu0 0
        %397 = vmatprep.subr.bf16.mxu0 0
        %398 = vmatpush1.bf16.msra.mxu0 0
        %399 = vmatprep.subr.bf16.mxu0 0
        %400 = vmatpush1.bf16.msra.mxu0 0
        %401 = vmatprep.subr.bf16.mxu0 0
        %402 = vmatpush1.bf16.msra.mxu0 0
        %403 = vmatprep.subr.bf16.mxu0 0
        %404 = vmatpush1.bf16.msra.mxu0 0
        %405 = vmatprep.subr.bf16.mxu0 0
        %406 = vmatpush1.bf16.msra.mxu0 %v385
        %407 = vmatprep.subr.bf16.mxu0 0
        %408 = vmatpush2.bf16.msra.mxu0 0
        %409 = vmatprep.subr.bf16.mxu0 0
        %410 = vmatpush2.bf16.msra.mxu0 0
        %411 = vmatprep.subr.bf16.mxu0 0
        %412 = vmatpush2.bf16.msra.mxu0 0
        %413 = vmatprep.subr.bf16.mxu0 0
        %414 = vmatpush2.bf16.msra.mxu0 0
        %415 = vmatprep.subr.bf16.mxu0 0
        %416 = vmatpush2.bf16.msra.mxu0 0
        %417 = vmatprep.subr.bf16.mxu0 0
        %418 = vmatpush2.bf16.msra.mxu0 0
        %419 = vmatprep.subr.bf16.mxu0 0
        %420 = vmatpush2.bf16.msra.mxu0 0
        %421 = vmatprep.subr.bf16.mxu0 0
        %422 = vmatpush2.bf16.msra.mxu0 0
        %423 = vmatprep.mubr.bf16.mxu0 0
        %424 = vmatmul.mubr.bf16.gmra.mxu0 %v389
        %v425 = vpop.f32.mrf.mxu0
        %v426 = vadd.f32 %v379, %v425
        %v427 = vpop.f32.mrf.mxu0
        %v428 = vpop.f32.mrf.mxu0
        %v429 = vpop.f32.mrf.mxu0
        %430 = vdwg.mxu0
        %431 = vst [vmem:[%s363] sm:$0xff] %v426
        %432 = vadd.xlane.f32.xlu0 %v426
        %v433 = vpop.xlane.xlu0 %432
        %v434 = vmul.f32 %v426, %v426
        %435 = vadd.xlane.f32.xlu0 %v434
        %v436 = vpop.xlane.xlu0 %435
        %vm437 = vcmask 7168
        %v438 = vsel %vm437, %v433, %v436
        %p439 = scmp.eq.s32.totalorder %s24, 0
        %p440 = scmp.eq.s32.totalorder %s25, 0
        %p441 = pnand %p439, %p440
        %p442 = pneg %p441
        // Predicated region
        $region74: #{upsample_forward.2} parent=68 // pred_check
          _
        $region75: #{upsample_forward.2} parent=68 // pred_check_branch
          %444 = sbr.rel (%p441) target = $region77
        $region76: #{upsample_forward.2} parent=68 // pred_region
          %vm445 = vcmask 15360
          %446 = vst.msk [vmem:[%s370] sm:$0xff] %vm445, %v438
        $region77: #{upsample_forward.2} parent=68 // pred_fallthru
          _
        %p447 = pneg %p442
        // Predicated region
        $region78: #{upsample_forward.2} parent=68 // pred_check
          _
        $region79: #{upsample_forward.2} parent=68 // pred_check_branch
          %449 = sbr.rel (%p442) target = $region81
        $region80: #{upsample_forward.2} parent=68 // pred_region
          %v450 = vld [vmem:[%s370] sm:$0xff]
          %v451 = vadd.f32 %v450, %v438
          %vm452 = vcmask 15360
          %453 = vst.msk [vmem:[%s370] sm:$0xff] %vm452, %v451
        $region81: #{upsample_forward.2} parent=68 // pred_fallthru
          _
        %p454 = scmp.lt.s32.totalorder %s22, 1
        %s455 = scalar_select %p454, %s22, 1
        %p456 = scmp.lt.s32.totalorder %s24, 3
        %s457 = scalar_select %p456, %s24, 3
        %p458 = scmp.lt.s32.totalorder %s23, 0
        %s459 = scalar_select %p458, %s23, 0
        %p460 = scmp.lt.s32.totalorder %s25, 1
        %s461 = scalar_select %p460, %s25, 1
        %s462 = smul.addr %s459, 2
        %s463 = sadd.s32 %s461, %s462
        %s464 = smul.addr %s457, 2
        %s465 = sadd.s32 %s463, %s464
        %s466 = smul.addr %s455, 8
        %s467 = sadd.s32 %s465, %s466
        %s468 = smul.addr %s467, 8
        %s469 = scalar_lea.vmem %s3, %s468
        %p470 = scmp.lt.s32.totalorder %s22, 1
        %s471 = scalar_select %p470, %s22, 1
        %p472 = scmp.lt.s32.totalorder %s23, 0
        %s473 = scalar_select %p472, %s23, 0
        %s474 = sadd.s32 %s473, %s471
        %s475 = smul.addr %s474, 8
        %s476 = scalar_lea.vmem %s4, %s475
        // Predicated region
        $region82: #{upsample_forward.2} parent=68 // pred_check
          %p477 = pneg %p150
        $region83: #{upsample_forward.2} parent=68 // pred_check_branch
          %479 = sbr.rel (%p477) target = $region85
        $region84: #{upsample_forward.2} parent=68 // pred_region
          _
        $region85: #{upsample_forward.2} parent=68 // pred_fallthru
          _
        // Predicated region
        $region86: #{upsample_forward.2} parent=68 // pred_check
          %p480 = pneg %p178
        $region87: #{upsample_forward.2} parent=68 // pred_check_branch
          %482 = sbr.rel (%p480) target = $region89
        $region88: #{upsample_forward.2} parent=68 // pred_region
          _
        $region89: #{upsample_forward.2} parent=68 // pred_fallthru
          _
      $region69: #{upsample_forward.2} parent=5 // pred_fallthru
        _
      %p483 = scmp.le.s32.totalorder 2, %s11
      // Predicated region
      $region90: #{upsample_forward.2} parent=5 // pred_check
        %p484 = pneg %p483
      $region91: #{upsample_forward.2} parent=5 // pred_check_branch
        %486 = sbr.rel (%p484) target = $region93
      $region92: #{upsample_forward.2} parent=5 // pred_region
        %s487 = ssub.s32 %s11, 2
        // Predicated region
        $region94: #{upsample_forward.2} parent=92 // pred_check
          %p488 = pneg %p156
        $region95: #{upsample_forward.2} parent=92 // pred_check_branch
          %490 = sbr.rel (%p488) target = $region97
        $region96: #{upsample_forward.2} parent=92 // pred_region
          %p491 = scmp.lt.s32.totalorder %s26, 1
          %s492 = scalar_select %p491, %s26, 1
          %p493 = scmp.lt.s32.totalorder %s28, 3
          %s494 = scalar_select %p493, %s28, 3
          %p495 = scmp.lt.s32.totalorder %s27, 0
          %s496 = scalar_select %p495, %s27, 0
          %p497 = scmp.lt.s32.totalorder %s29, 1
          %s498 = scalar_select %p497, %s29, 1
          %s499 = smul.addr %s496, 2
          %s500 = sadd.s32 %s498, %s499
          %s501 = smul.addr %s494, 2
          %s502 = sadd.s32 %s500, %s501
          %s503 = smul.addr %s492, 8
          %s504 = sadd.s32 %s502, %s503
          %s505 = smul.addr %s504, 8
          %s506 = scalar_lea.vmem %s3, %s505
        $region97: #{upsample_forward.2} parent=92 // pred_fallthru
          _
        // Predicated region
        $region98: #{upsample_forward.2} parent=92 // pred_check
          %p507 = pneg %p184
        $region99: #{upsample_forward.2} parent=92 // pred_check_branch
          %509 = sbr.rel (%p507) target = $region101
        $region100: #{upsample_forward.2} parent=92 // pred_region
          %p510 = scmp.lt.s32.totalorder %s26, 1
          %s511 = scalar_select %p510, %s26, 1
          %p512 = scmp.lt.s32.totalorder %s27, 0
          %s513 = scalar_select %p512, %s27, 0
          %s514 = sadd.s32 %s513, %s511
          %s515 = smul.addr %s514, 8
          %s516 = scalar_lea.vmem %s4, %s515
        $region101: #{upsample_forward.2} parent=92 // pred_fallthru
          _
      $region93: #{upsample_forward.2} parent=5 // pred_fallthru
        _
    $region6: #{upsample_forward.2} parent=1 // loop_footer
      %s15 = sadd.s32 1, %s11
    $region7: #{upsample_forward.2} parent=1 // loop_footer_branch
      %10 = sbr.rel target = $region3
    $region8: #{upsample_forward.2} parent=1 // loop_exit
      _

// kernel: upsample_forward.3
$region0: #{upsample_forward.3}
  #allocation0 [shape = 'u32[]', space=smem, size = 0x4, offset = 0x4, fixed_abs, tag = 'smem constant byte address 0x4 - core index']
  #allocation1 [shape = 'u32[144,128]{1,0:T(1,128)}', space=vmem, size = 0x12000, scoped, tag = 'internal scratch']
  %s0 = inlined_call_operand.vmem [shape: f32[2,4,1,8,256], index: 0, kind: input, shape index: {}]
  %s1 = inlined_call_operand.vmem [shape: f32[2,1,8,2], index: 1, kind: input, shape index: {}]
  %s2 = inlined_call_operand.vmem [shape: f32[2,1,8,1], index: 2, kind: input, shape index: {}]
  %s3 = inlined_call_operand.vmem [shape: f32[2,4,1,8,256], index: 3, kind: output, shape index: {}]
  %s4 = sld [smem:[#allocation0]]
  $region45: #{upsample_forward.3} parent=0
    _
  %s6 = ssub.s32 1, %s4
  %s7 = scalar_select 0, %s6, %s4
  loop: start=0, step=1, limit=18
  $region2: #{upsample_forward.3} parent=0 // loop_pre_header
    _
  $region3: #{upsample_forward.3} parent=0 // loop_header
    %s9 = sphi 0, %s13
    %p10 = scmp.ge.s32.totalorder %s9, 18
    %s16 = sphi 0, %s42
    %s17 = sphi 0, %s38
    %s18 = sphi 0, %s34
    %s19 = sphi 0, %s30
    %s20 = sphi 0, %s16
    %s21 = sphi 0, %s17
    %s22 = sphi 0, %s18
    %s23 = sphi 0, %s19
    %s24 = sphi 0, %s20
    %s25 = sphi 0, %s21
    %s26 = sphi 0, %s22
    %s27 = sphi 0, %s23
    %s51 = sphi 0, %s53
    %s54 = sphi 0, %s51
    %s55 = sphi 0, %s54
    %s71 = sphi 0, %s55
    %s79 = sphi 0, %s81
    %s82 = sphi 0, %s79
    %s83 = sphi 0, %s82
    %s99 = sphi 0, %s83
    %s107 = sphi 0, %s109
    %s110 = sphi 0, %s107
    %s111 = sphi 0, %s110
    %s127 = sphi 0, %s111
    %s139 = sphi 0, %s141
    %s142 = sphi 0, %s139
    %s143 = sphi 0, %s142
    %s159 = sphi 0, %s143
  $region4: #{upsample_forward.3} parent=0 // loop_header_branch
    %12 = sbr.rel (%p10) target = $region8
  $region5: #{upsample_forward.3} parent=0 // loop_body
    %s14 = ssub.s32 %s9, 1
    %s15 = ssub.s32 %s9, 2
    %s28 = sadd.s32 1, %s19
    %p29 = scmp.ge.s32.totalorder %s28, 2
    %s30 = scalar_select %p29, 0, %s28
    %s31 = sadd.s32 1, %s18
    %s32 = scalar_select %p29, %s31, %s18
    %p33 = scmp.ge.s32.totalorder %s32, 4
    %s34 = scalar_select %p33, 0, %s32
    %s35 = sadd.s32 1, %s17
    %s36 = scalar_select %p33, %s35, %s17
    %p37 = scmp.ge.s32.totalorder %s36, 1
    %s38 = scalar_select %p37, 0, %s36
    %s39 = sadd.s32 1, %s16
    %s40 = scalar_select %p37, %s39, %s16
    %p41 = scmp.ge.s32.totalorder %s40, 2
    %s42 = scalar_select %p41, 0, %s40
    %s43 = ssub.s32 %s16, %s42
    %s44 = ssub.s32 %s18, %s34
    %s45 = sor.u32 %s43, %s44
    %s46 = ssub.s32 %s17, %s38
    %s47 = sor.u32 %s45, %s46
    %s48 = ssub.s32 %s19, %s30
    %s49 = sor.u32 %s47, %s48
    %p50 = scmp.eq.s32.totalorder %s49, 0
    %s52 = sadd.s32 %s51, 1
    %s53 = scalar_select %p50, %s51, %s52
    %p56 = pneg %p50
    %p57 = scmp.eq.s32.totalorder %s9, 15
    %p58 = por %p56, %p57
    %p59 = scmp.ne.s32.totalorder %s51, %s54
    %p60 = scmp.eq.s32.totalorder %s9, 0
    %p61 = por %p59, %p60
    %p62 = scmp.ne.s32.totalorder %s51, %s54
    %p63 = scmp.eq.s32.totalorder %s14, 15
    %p64 = por %p62, %p63
    %p65 = scmp.ne.s32.totalorder %s54, %s55
    %p66 = scmp.eq.s32.totalorder %s14, 0
    %p67 = por %p65, %p66
    %p68 = scmp.ne.s32.totalorder %s54, %s55
    %p69 = scmp.eq.s32.totalorder %s15, 15
    %p70 = por %p68, %p69
    %p72 = scmp.ne.s32.totalorder %s55, %s71
    %p73 = scmp.eq.s32.totalorder %s15, 0
    %p74 = por %p72, %p73
    %s75 = ssub.s32 %s16, %s42
    %s76 = ssub.s32 %s17, %s38
    %s77 = sor.u32 %s75, %s76
    %p78 = scmp.eq.s32.totalorder %s77, 0
    %s80 = sadd.s32 %s79, 1
    %s81 = scalar_select %p78, %s79, %s80
    %p84 = pneg %p78
    %p85 = scmp.eq.s32.totalorder %s9, 15
    %p86 = por %p84, %p85
    %p87 = scmp.ne.s32.totalorder %s79, %s82
    %p88 = scmp.eq.s32.totalorder %s9, 0
    %p89 = por %p87, %p88
    %p90 = scmp.ne.s32.totalorder %s79, %s82
    %p91 = scmp.eq.s32.totalorder %s14, 15
    %p92 = por %p90, %p91
    %p93 = scmp.ne.s32.totalorder %s82, %s83
    %p94 = scmp.eq.s32.totalorder %s14, 0
    %p95 = por %p93, %p94
    %p96 = scmp.ne.s32.totalorder %s82, %s83
    %p97 = scmp.eq.s32.totalorder %s15, 15
    %p98 = por %p96, %p97
    %p100 = scmp.ne.s32.totalorder %s83, %s99
    %p101 = scmp.eq.s32.totalorder %s15, 0
    %p102 = por %p100, %p101
    %s103 = ssub.s32 %s16, %s42
    %s104 = ssub.s32 %s17, %s38
    %s105 = sor.u32 %s103, %s104
    %p106 = scmp.eq.s32.totalorder %s105, 0
    %s108 = sadd.s32 %s107, 1
    %s109 = scalar_select %p106, %s107, %s108
    %p112 = pneg %p106
    %p113 = scmp.eq.s32.totalorder %s9, 15
    %p114 = por %p112, %p113
    %p115 = scmp.ne.s32.totalorder %s107, %s110
    %p116 = scmp.eq.s32.totalorder %s9, 0
    %p117 = por %p115, %p116
    %p118 = scmp.ne.s32.totalorder %s107, %s110
    %p119 = scmp.eq.s32.totalorder %s14, 15
    %p120 = por %p118, %p119
    %p121 = scmp.ne.s32.totalorder %s110, %s111
    %p122 = scmp.eq.s32.totalorder %s14, 0
    %p123 = por %p121, %p122
    %p124 = scmp.ne.s32.totalorder %s110, %s111
    %p125 = scmp.eq.s32.totalorder %s15, 15
    %p126 = por %p124, %p125
    %p128 = scmp.ne.s32.totalorder %s111, %s127
    %p129 = scmp.eq.s32.totalorder %s15, 0
    %p130 = por %p128, %p129
    %s131 = ssub.s32 %s16, %s42
    %s132 = ssub.s32 %s18, %s34
    %s133 = sor.u32 %s131, %s132
    %s134 = ssub.s32 %s17, %s38
    %s135 = sor.u32 %s133, %s134
    %s136 = ssub.s32 %s19, %s30
    %s137 = sor.u32 %s135, %s136
    %p138 = scmp.eq.s32.totalorder %s137, 0
    %s140 = sadd.s32 %s139, 1
    %s141 = scalar_select %p138, %s139, %s140
    %p144 = pneg %p138
    %p145 = scmp.eq.s32.totalorder %s9, 15
    %p146 = por %p144, %p145
    %p147 = scmp.ne.s32.totalorder %s139, %s142
    %p148 = scmp.eq.s32.totalorder %s9, 0
    %p149 = por %p147, %p148
    %p150 = scmp.ne.s32.totalorder %s139, %s142
    %p151 = scmp.eq.s32.totalorder %s14, 15
    %p152 = por %p150, %p151
    %p153 = scmp.ne.s32.totalorder %s142, %s143
    %p154 = scmp.eq.s32.totalorder %s14, 0
    %p155 = por %p153, %p154
    %p156 = scmp.ne.s32.totalorder %s142, %s143
    %p157 = scmp.eq.s32.totalorder %s15, 15
    %p158 = por %p156, %p157
    %p160 = scmp.ne.s32.totalorder %s143, %s159
    %p161 = scmp.eq.s32.totalorder %s15, 0
    %p162 = por %p160, %p161
    %p163 = scmp.le.s32.totalorder 1, %s9
    %p164 = scmp.lt.s32.totalorder %s9, 17
    %p165 = pnand %p163, %p164
    %p166 = pneg %p165
    // Predicated region
    $region9: #{upsample_forward.3} parent=5 // pred_check
      _
    $region10: #{upsample_forward.3} parent=5 // pred_check_branch
      %168 = sbr.rel (%p165) target = $region12
    $region11: #{upsample_forward.3} parent=5 // pred_region
      %s169 = ssub.s32 %s9, 1
    $region12: #{upsample_forward.3} parent=5 // pred_fallthru
      _
    %p170 = scmp.lt.s32.totalorder %s9, 16
    // Predicated region
    $region13: #{upsample_forward.3} parent=5 // pred_check
      %p171 = pneg %p170
    $region14: #{upsample_forward.3} parent=5 // pred_check_branch
      %173 = sbr.rel (%p171) target = $region16
    $region15: #{upsample_forward.3} parent=5 // pred_region
      // Predicated region
      $region17: #{upsample_forward.3} parent=15 // pred_check
        %p174 = pneg %p61
      $region18: #{upsample_forward.3} parent=15 // pred_check_branch
        %176 = sbr.rel (%p174) target = $region20
      $region19: #{upsample_forward.3} parent=15 // pred_region
        %p177 = scmp.lt.s32.totalorder %s16, 1
        %s178 = scalar_select %p177, %s16, 1
        %p179 = scmp.lt.s32.totalorder %s18, 3
        %s180 = scalar_select %p179, %s18, 3
        %p181 = scmp.lt.s32.totalorder %s17, 0
        %s182 = scalar_select %p181, %s17, 0
        %p183 = scmp.lt.s32.totalorder %s19, 1
        %s184 = scalar_select %p183, %s19, 1
        %s185 = smul.addr %s182, 2
        %s186 = sadd.s32 %s184, %s185
        %s187 = smul.addr %s180, 2
        %s188 = sadd.s32 %s186, %s187
        %s189 = smul.addr %s178, 8
        %s190 = sadd.s32 %s188, %s189
        %s191 = smul.addr %s190, 8
        %s192 = scalar_lea.vmem %s0, %s191
      $region20: #{upsample_forward.3} parent=15 // pred_fallthru
        _
      // Predicated region
      $region21: #{upsample_forward.3} parent=15 // pred_check
        %p193 = pneg %p89
      $region22: #{upsample_forward.3} parent=15 // pred_check_branch
        %195 = sbr.rel (%p193) target = $region24
      $region23: #{upsample_forward.3} parent=15 // pred_region
        %p196 = scmp.lt.s32.totalorder %s16, 1
        %s197 = scalar_select %p196, %s16, 1
        %p198 = scmp.lt.s32.totalorder %s17, 0
        %s199 = scalar_select %p198, %s17, 0
        %s200 = sadd.s32 %s199, %s197
        %s201 = smul.addr %s200, 8
        %s202 = scalar_lea.vmem %s1, %s201
      $region24: #{upsample_forward.3} parent=15 // pred_fallthru
        _
      // Predicated region
      $region25: #{upsample_forward.3} parent=15 // pred_check
        %p203 = pneg %p117
      $region26: #{upsample_forward.3} parent=15 // pred_check_branch
        %205 = sbr.rel (%p203) target = $region28
      $region27: #{upsample_forward.3} parent=15 // pred_region
        %p206 = scmp.lt.s32.totalorder %s16, 1
        %s207 = scalar_select %p206, %s16, 1
        %p208 = scmp.lt.s32.totalorder %s17, 0
        %s209 = scalar_select %p208, %s17, 0
        %s210 = sadd.s32 %s209, %s207
        %s211 = smul.addr %s210, 8
        %s212 = scalar_lea.vmem %s2, %s211
      $region28: #{upsample_forward.3} parent=15 // pred_fallthru
        _
    $region16: #{upsample_forward.3} parent=5 // pred_fallthru
      _
    %p213 = scmp.le.s32.totalorder 1, %s9
    %p214 = scmp.lt.s32.totalorder %s9, 17
    %p215 = pnand %p213, %p214
    %p216 = pneg %p215
    // Predicated region
    $region29: #{upsample_forward.3} parent=5 // pred_check
      _
    $region30: #{upsample_forward.3} parent=5 // pred_check_branch
      %218 = sbr.rel (%p215) target = $region32
    $region31: #{upsample_forward.3} parent=5 // pred_region
      %s219 = ssub.s32 %s9, 1
      %p220 = scmp.lt.s32.totalorder %s20, 1
      %s221 = scalar_select %p220, %s20, 1
      %p222 = scmp.lt.s32.totalorder %s22, 3
      %s223 = scalar_select %p222, %s22, 3
      %p224 = scmp.lt.s32.totalorder %s21, 0
      %s225 = scalar_select %p224, %s21, 0
      %p226 = scmp.lt.s32.totalorder %s23, 1
      %s227 = scalar_select %p226, %s23, 1
      %s228 = smul.addr %s225, 2
      %s229 = sadd.s32 %s227, %s228
      %s230 = smul.addr %s223, 2
      %s231 = sadd.s32 %s229, %s230
      %s232 = smul.addr %s221, 8
      %s233 = sadd.s32 %s231, %s232
      %s234 = smul.addr %s233, 8
      %s235 = scalar_lea.vmem %s0, %s234
      %p236 = pneg %p67
      %p237 = pneg %p64
      %p238 = scmp.lt.s32.totalorder %s20, 1
      %s239 = scalar_select %p238, %s20, 1
      %p240 = scmp.lt.s32.totalorder %s21, 0
      %s241 = scalar_select %p240, %s21, 0
      %s242 = sadd.s32 %s241, %s239
      %s243 = smul.addr %s242, 8
      %s244 = scalar_lea.vmem %s1, %s243
      %p245 = pneg %p95
      %p246 = pneg %p92
      %p247 = scmp.lt.s32.totalorder %s20, 1
      %s248 = scalar_select %p247, %s20, 1
      %p249 = scmp.lt.s32.totalorder %s21, 0
      %s250 = scalar_select %p249, %s21, 0
      %s251 = sadd.s32 %s250, %s248
      %s252 = smul.addr %s251, 8
      %s253 = scalar_lea.vmem %s2, %s252
      %p254 = pneg %p123
      %p255 = pneg %p120
      %p256 = pneg %p155
      %p257 = pneg %p152
      %p258 = scmp.lt.s32.totalorder %s20, 1
      %s259 = scalar_select %p258, %s20, 1
      %p260 = scmp.lt.s32.totalorder %s22, 3
      %s261 = scalar_select %p260, %s22, 3
      %p262 = scmp.lt.s32.totalorder %s21, 0
      %s263 = scalar_select %p262, %s21, 0
      %p264 = scmp.lt.s32.totalorder %s23, 1
      %s265 = scalar_select %p264, %s23, 1
      %s266 = smul.addr %s263, 2
      %s267 = sadd.s32 %s265, %s266
      %s268 = smul.addr %s261, 2
      %s269 = sadd.s32 %s267, %s268
      %s270 = smul.addr %s259, 8
      %s271 = sadd.s32 %s269, %s270
      %s272 = smul.addr %s271, 8
      %s273 = scalar_lea.vmem %s3, %s272
      %p274 = scmp.lt.s32.totalorder %s20, 1
      %s275 = scalar_select %p274, %s20, 1
      %p276 = scmp.lt.s32.totalorder %s22, 3
      %s277 = scalar_select %p276, %s22, 3
      %p278 = scmp.lt.s32.totalorder %s21, 0
      %s279 = scalar_select %p278, %s21, 0
      %p280 = scmp.lt.s32.totalorder %s23, 1
      %s281 = scalar_select %p280, %s23, 1
      %s282 = smul.addr %s279, 2
      %s283 = sadd.s32 %s281, %s282
      %s284 = smul.addr %s277, 2
      %s285 = sadd.s32 %s283, %s284
      %s286 = smul.addr %s275, 8
      %s287 = sadd.s32 %s285, %s286
      %s288 = smul.addr %s287, 8
      %s289 = scalar_lea.vmem %s0, %s288
      %p290 = scmp.lt.s32.totalorder %s20, 1
      %s291 = scalar_select %p290, %s20, 1
      %p292 = scmp.lt.s32.totalorder %s21, 0
      %s293 = scalar_select %p292, %s21, 0
      %s294 = sadd.s32 %s293, %s291
      %s295 = smul.addr %s294, 8
      %s296 = scalar_lea.vmem %s1, %s295
      %p297 = scmp.lt.s32.totalorder %s20, 1
      %s298 = scalar_select %p297, %s20, 1
      %p299 = scmp.lt.s32.totalorder %s21, 0
      %s300 = scalar_select %p299, %s21, 0
      %s301 = sadd.s32 %s300, %s298
      %s302 = smul.addr %s301, 8
      %s303 = scalar_lea.vmem %s2, %s302
      %p304 = scmp.lt.s32.totalorder %s20, 1
      %s305 = scalar_select %p304, %s20, 1
      %p306 = scmp.lt.s32.totalorder %s22, 3
      %s307 = scalar_select %p306, %s22, 3
      %p308 = scmp.lt.s32.totalorder %s21, 0
      %s309 = scalar_select %p308, %s21, 0
      %p310 = scmp.lt.s32.totalorder %s23, 1
      %s311 = scalar_select %p310, %s23, 1
      %s312 = smul.addr %s309, 2
      %s313 = sadd.s32 %s311, %s312
      %s314 = smul.addr %s307, 2
      %s315 = sadd.s32 %s313, %s314
      %s316 = smul.addr %s305, 8
      %s317 = sadd.s32 %s315, %s316
      %s318 = smul.addr %s317, 8
      %s319 = scalar_lea.vmem %s3, %s318
      %v320 = vld [vmem:[%s289] sm:$0xff]
      %v321 = vld [vmem:[%s296] sm:$0xff]
      %v322 = vmul.f32 %v321, 0.0009765625
      %v323 = vmul.f32 %v322, %v322
      %325 = vrot.lane.b32.xlu0 %v323, 1
      %v326 = vpop.permute.xlu0 %325
      %v328 = vsub.f32 %v322, %v326
      %v329 = vmax.f32 %v328, 0.0
      %331 = vset.pattern.permute.xlu0 0
      %332 = vperm.xlu0 %331, %v322
      %v333 = vpop.permute.xlu0 %332
      %v335 = vsub.f32 %v320, %v333
      %v336 = vadd.f32 %v329, 1e-05
      %v337 = vrsqrt.pop %v336
      %339 = vset.pattern.permute.xlu0 1
      %340 = vperm.xlu0 %339, %v337
      %v341 = vpop.permute.xlu0 %340
      %v343 = vmul.f32 %v335, %v341
      %v344 = vmax.f32 %v343, 0.0
      %v345 = vld [vmem:[%s303] sm:$0xff]
      %347 = vset.pattern.permute.xlu0 0
      %348 = vperm.xlu0 %347, %v345
      %v349 = vpop.permute.xlu0 %348
      %v351 = vmul.f32 %v344, %v349
      %352 = vst [vmem:[%s319] sm:$0xff] %v351
      %p353 = scmp.lt.s32.totalorder %s20, 1
      %s354 = scalar_select %p353, %s20, 1
      %p355 = scmp.lt.s32.totalorder %s22, 3
      %s356 = scalar_select %p355, %s22, 3
      %p357 = scmp.lt.s32.totalorder %s21, 0
      %s358 = scalar_select %p357, %s21, 0
      %p359 = scmp.lt.s32.totalorder %s23, 1
      %s360 = scalar_select %p359, %s23, 1
      %s361 = smul.addr %s358, 2
      %s362 = sadd.s32 %s360, %s361
      %s363 = smul.addr %s356, 2
      %s364 = sadd.s32 %s362, %s363
      %s365 = smul.addr %s354, 8
      %s366 = sadd.s32 %s364, %s365
      %s367 = smul.addr %s366, 8
      %s368 = scalar_lea.vmem %s3, %s367
      // Predicated region
      $region33: #{upsample_forward.3} parent=31 // pred_check
        %p369 = pneg %p152
      $region34: #{upsample_forward.3} parent=31 // pred_check_branch
        %371 = sbr.rel (%p369) target = $region36
      $region35: #{upsample_forward.3} parent=31 // pred_region
        _
      $region36: #{upsample_forward.3} parent=31 // pred_fallthru
        _
    $region32: #{upsample_forward.3} parent=5 // pred_fallthru
      _
    %p372 = scmp.le.s32.totalorder 2, %s9
    // Predicated region
    $region37: #{upsample_forward.3} parent=5 // pred_check
      %p373 = pneg %p372
    $region38: #{upsample_forward.3} parent=5 // pred_check_branch
      %375 = sbr.rel (%p373) target = $region40
    $region39: #{upsample_forward.3} parent=5 // pred_region
      %s376 = ssub.s32 %s9, 2
      // Predicated region
      $region41: #{upsample_forward.3} parent=39 // pred_check
        %p377 = pneg %p158
      $region42: #{upsample_forward.3} parent=39 // pred_check_branch
        %379 = sbr.rel (%p377) target = $region44
      $region43: #{upsample_forward.3} parent=39 // pred_region
        %p380 = scmp.lt.s32.totalorder %s24, 1
        %s381 = scalar_select %p380, %s24, 1
        %p382 = scmp.lt.s32.totalorder %s26, 3
        %s383 = scalar_select %p382, %s26, 3
        %p384 = scmp.lt.s32.totalorder %s25, 0
        %s385 = scalar_select %p384, %s25, 0
        %p386 = scmp.lt.s32.totalorder %s27, 1
        %s387 = scalar_select %p386, %s27, 1
        %s388 = smul.addr %s385, 2
        %s389 = sadd.s32 %s387, %s388
        %s390 = smul.addr %s383, 2
        %s391 = sadd.s32 %s389, %s390
        %s392 = smul.addr %s381, 8
        %s393 = sadd.s32 %s391, %s392
        %s394 = smul.addr %s393, 8
        %s395 = scalar_lea.vmem %s3, %s394
      $region44: #{upsample_forward.3} parent=39 // pred_fallthru
        _
    $region40: #{upsample_forward.3} parent=5 // pred_fallthru
      _
  $region6: #{upsample_forward.3} parent=0 // loop_footer
    %s13 = sadd.s32 1, %s9
  $region7: #{upsample_forward.3} parent=0 // loop_footer_branch
    %8 = sbr.rel target = $region3
  $region8: #{upsample_forward.3} parent=0 // loop_exit
    _

</llo_original>
